<compile_context>
chip_gen: v7x
topology: tpu7x:2x2x1
jax: 0.10.0
libtpu: 0.0.40
codegen_flags: <defaults>
</compile_context>

<pallas_src>
import jax
import jax.numpy as jnp
from jax import lax
from jax.experimental import pallas as pl
from jax.experimental.pallas import tpu as pltpu


def _sam_kernel(w_ref, x_ref, o_ref):
    # w_ref: SMEM (8,) f32 : [w_mean_k0, w_mean_k1, w_mean_k2,
    #                         w_max_k0,  w_max_k1,  w_max_k2,  bias, pad]
    # x_ref: VMEM (Nb, C, L)   o_ref: VMEM (Nb, C, L)
    x = x_ref[...]
    xf = x.astype(jnp.float32)          # compute in f32 even for bf16 I/O
    L = xf.shape[-1]

    x_mean = jnp.mean(xf, axis=1, keepdims=True)   # (Nb, 1, L)
    x_max = jnp.max(xf, axis=1, keepdims=True)     # (Nb, 1, L)

    def shifts(a):
        # Zero-padded neighbours along L: left[l] = a[l-1], right[l] = a[l+1].
        zero = jnp.zeros((*a.shape[:-1], 1), a.dtype)
        left = jnp.concatenate([zero, a[..., : L - 1]], axis=2)
        right = jnp.concatenate([a[..., 1:], zero], axis=2)
        return left, right

    mean_l, mean_r = shifts(x_mean)
    max_l, max_r = shifts(x_max)

    # Conv1d(2->1, k=3, pad=1): out[l] = sum_c sum_k w[c,k] * xcat[c, l+k-1] + b
    conv = (w_ref[0] * mean_l + w_ref[1] * x_mean + w_ref[2] * mean_r
            + w_ref[3] * max_l + w_ref[4] * x_max + w_ref[5] * max_r
            + w_ref[6])                            # (Nb, 1, L)

    gate = jax.nn.sigmoid(conv)                    # (Nb, 1, L), f32
    o_ref[...] = (xf * gate).astype(o_ref.dtype)   # broadcast over channels


def sam_forward(x, conv_weight, conv_bias, *, block_bytes_target=2 << 20):
    """x: (N, C, L) f32 or bf16; conv_weight: (1, 2, 3); conv_bias: (1,)."""
    N, C, L = x.shape
    slab_bytes = C * L * x.dtype.itemsize

    # Fold several batch elements into each block (~1-4 MiB target), but keep
    # at least 2 grid steps when N > 1 so v7x's two TensorCores both get work.
    nb = max(1, min(N, block_bytes_target // max(slab_bytes, 1)))
    if nb >= N and N > 1:
        nb = (N + 1) // 2
    nb = int(nb)
    grid = (pl.cdiv(N, nb),)

    block_bytes = nb * slab_bytes
    # in + out blocks, double-buffered, plus f32 temporaries -> explicit limit.
    vmem_limit = int(min(100 * 2**20, max(32 * 2**20, 8 * block_bytes)))

    # Pack the 6 conv taps + bias into a small SMEM scalar table (pad to 8).
    w_flat = jnp.concatenate(
        [conv_weight.reshape(-1), conv_bias.reshape(-1),
         jnp.zeros((1,), jnp.float32)]).astype(jnp.float32)     # (8,)

    return pl.pallas_call(
        _sam_kernel,
        out_shape=jax.ShapeDtypeStruct((N, C, L), x.dtype),
        grid=grid,
        in_specs=[
            # Whole weight table in SMEM: loaded once, invariant across steps.
            pl.BlockSpec(memory_space=pltpu.MemorySpace.SMEM),
            pl.BlockSpec((nb, C, L), lambda n: (n, 0, 0)),
        ],
        out_specs=pl.BlockSpec((nb, C, L), lambda n: (n, 0, 0)),
        compiler_params=pltpu.CompilerParams(
            dimension_semantics=("parallel",),
            vmem_limit_bytes=vmem_limit),
    )(w_flat, x)


def sam_reference(x, conv_weight, conv_bias):
    """Pure-JAX reference matching the PyTorch module."""
    xf = x.astype(jnp.float32)
    x_mean = jnp.mean(xf, axis=1, keepdims=True)
    x_max = jnp.max(xf, axis=1, keepdims=True)
    x_cat = jnp.concatenate([x_mean, x_max], axis=1)             # (N,2,L)
    conv = lax.conv_general_dilated(
        x_cat, conv_weight.astype(jnp.float32), window_strides=(1,),
        padding=((1, 1),), dimension_numbers=("NCH", "OIH", "NCH"))
    conv = conv + conv_bias.reshape(1, 1, 1)
    gate = jax.nn.sigmoid(conv)
    return (xf * gate).astype(x.dtype)


if __name__ == "__main__":
    key = jax.random.PRNGKey(0)
    kx, kw, kb = jax.random.split(key, 3)

    N, C, L = 2, 4, 128
    x = jax.random.normal(kx, (N, C, L), dtype=jnp.float32)

    # Deterministic synthetic Conv1d(2 -> 1, kernel_size=3) parameters.
    fan_in = 2 * 3
    bound = 1.0 / (fan_in ** 0.5)
    conv_weight = jax.random.uniform(kw, (1, 2, 3), jnp.float32, -bound, bound)
    conv_bias = jax.random.uniform(kb, (1,), jnp.float32, -bound, bound)

    out = sam_forward(x, conv_weight, conv_bias)
    out = jax.block_until_ready(out)

    ref = sam_reference(x, conv_weight, conv_bias)
    assert out.shape == (N, C, L)
    assert jnp.allclose(out, ref, atol=1e-5, rtol=1e-5), "mismatch vs reference"

    print("KERNEL_OK")
</pallas_src>

<mosaic_0001>
module attributes {stable_mosaic.version = 11 : i64} {
  func.func @_sam_kernel(%arg0: i32, %arg1: memref<8xf32, #tpu.memory_space<smem>>, %arg2: memref<1x4x128xf32, #tpu.memory_space<vmem>>, %arg3: memref<1x4x128xf32, #tpu.memory_space<vmem>>) attributes {dimension_semantics = [#tpu.dimension_semantics<parallel>], iteration_bounds = array<i64: 2>, scalar_prefetch = 0 : i64, scratch_operands = 0 : i64, tpu.core_type = #tpu.core_type<tc>, window_params = [{transform_indices = @transform_0, window_bounds = array<i64: 8>}, {transform_indices = @transform_1, window_bounds = array<i64: 1, 4, 128>}, {transform_indices = @transform_2, window_bounds = array<i64: 1, 4, 128>}]} {
    %c0 = arith.constant 0 : index
    %c0_0 = arith.constant 0 : index
    %c0_1 = arith.constant 0 : index
    %0 = vector.load %arg2[%c0, %c0_0, %c0_1] : memref<1x4x128xf32, #tpu.memory_space<vmem>>, vector<1x4x128xf32>
    %cst = arith.constant dense<0.000000e+00> : vector<1x128xf32>
    %1 = vector.multi_reduction <add>, %0, %cst [1] : vector<1x4x128xf32> to vector<1x128xf32>
    %2 = vector.shape_cast %1 : vector<1x128xf32> to vector<1x1x128xf32>
    %cst_2 = arith.constant 4.000000e+00 : f32
    %3 = vector.broadcast %cst_2 : f32 to vector<1x1x128xf32>
    %4 = arith.divf %2, %3 : vector<1x1x128xf32>
    %cst_3 = arith.constant dense<0xFF800000> : vector<1x128xf32>
    %5 = vector.multi_reduction <maximumf>, %0, %cst_3 [1] : vector<1x4x128xf32> to vector<1x128xf32>
    %6 = vector.shape_cast %5 : vector<1x128xf32> to vector<1x1x128xf32>
    %cst_4 = arith.constant 0.000000e+00 : f32
    %7 = vector.broadcast %cst_4 : f32 to vector<1x1x1xf32>
    %8 = vector.extract_strided_slice %4 {offsets = [0, 0, 0], sizes = [1, 1, 127], strides = [1, 1, 1]} : vector<1x1x128xf32> to vector<1x1x127xf32>
    %9 = tpu.concatenate %7, %8 in 2 : vector<1x1x1xf32>, vector<1x1x127xf32> -> vector<1x1x128xf32>
    %10 = vector.extract_strided_slice %4 {offsets = [0, 0, 1], sizes = [1, 1, 127], strides = [1, 1, 1]} : vector<1x1x128xf32> to vector<1x1x127xf32>
    %11 = tpu.concatenate %10, %7 in 2 : vector<1x1x127xf32>, vector<1x1x1xf32> -> vector<1x1x128xf32>
    %cst_5 = arith.constant 0.000000e+00 : f32
    %12 = vector.broadcast %cst_5 : f32 to vector<1x1x1xf32>
    %13 = vector.extract_strided_slice %6 {offsets = [0, 0, 0], sizes = [1, 1, 127], strides = [1, 1, 1]} : vector<1x1x128xf32> to vector<1x1x127xf32>
    %14 = tpu.concatenate %12, %13 in 2 : vector<1x1x1xf32>, vector<1x1x127xf32> -> vector<1x1x128xf32>
    %15 = vector.extract_strided_slice %6 {offsets = [0, 0, 1], sizes = [1, 1, 127], strides = [1, 1, 1]} : vector<1x1x128xf32> to vector<1x1x127xf32>
    %16 = tpu.concatenate %15, %12 in 2 : vector<1x1x127xf32>, vector<1x1x1xf32> -> vector<1x1x128xf32>
    %c0_6 = arith.constant 0 : index
    %17 = memref.load %arg1[%c0_6] : memref<8xf32, #tpu.memory_space<smem>>
    %18 = vector.broadcast %17 : f32 to vector<1x1x128xf32>
    %19 = arith.mulf %18, %9 : vector<1x1x128xf32>
    %c1 = arith.constant 1 : index
    %20 = memref.load %arg1[%c1] : memref<8xf32, #tpu.memory_space<smem>>
    %21 = vector.broadcast %20 : f32 to vector<1x1x128xf32>
    %22 = arith.mulf %21, %4 : vector<1x1x128xf32>
    %23 = arith.addf %19, %22 : vector<1x1x128xf32>
    %c2 = arith.constant 2 : index
    %24 = memref.load %arg1[%c2] : memref<8xf32, #tpu.memory_space<smem>>
    %25 = vector.broadcast %24 : f32 to vector<1x1x128xf32>
    %26 = arith.mulf %25, %11 : vector<1x1x128xf32>
    %27 = arith.addf %23, %26 : vector<1x1x128xf32>
    %c3 = arith.constant 3 : index
    %28 = memref.load %arg1[%c3] : memref<8xf32, #tpu.memory_space<smem>>
    %29 = vector.broadcast %28 : f32 to vector<1x1x128xf32>
    %30 = arith.mulf %29, %14 : vector<1x1x128xf32>
    %31 = arith.addf %27, %30 : vector<1x1x128xf32>
    %c4 = arith.constant 4 : index
    %32 = memref.load %arg1[%c4] : memref<8xf32, #tpu.memory_space<smem>>
    %33 = vector.broadcast %32 : f32 to vector<1x1x128xf32>
    %34 = arith.mulf %33, %6 : vector<1x1x128xf32>
    %35 = arith.addf %31, %34 : vector<1x1x128xf32>
    %c5 = arith.constant 5 : index
    %36 = memref.load %arg1[%c5] : memref<8xf32, #tpu.memory_space<smem>>
    %37 = vector.broadcast %36 : f32 to vector<1x1x128xf32>
    %38 = arith.mulf %37, %16 : vector<1x1x128xf32>
    %39 = arith.addf %35, %38 : vector<1x1x128xf32>
    %c6 = arith.constant 6 : index
    %40 = memref.load %arg1[%c6] : memref<8xf32, #tpu.memory_space<smem>>
    %41 = vector.broadcast %40 : f32 to vector<1x1x128xf32>
    %42 = arith.addf %39, %41 : vector<1x1x128xf32>
    %43 = arith.negf %42 : vector<1x1x128xf32>
    %44 = math.exp %43 : vector<1x1x128xf32>
    %cst_7 = arith.constant 1.000000e+00 : f32
    %45 = vector.broadcast %cst_7 : f32 to vector<1x1x128xf32>
    %46 = arith.addf %45, %44 : vector<1x1x128xf32>
    %47 = arith.divf %45, %46 : vector<1x1x128xf32>
    %48 = vector.broadcast %47 : vector<1x1x128xf32> to vector<1x4x128xf32>
    %49 = arith.mulf %0, %48 : vector<1x4x128xf32>
    %c0_8 = arith.constant 0 : index
    %c0_9 = arith.constant 0 : index
    %c0_10 = arith.constant 0 : index
    %50 = vector.load %arg3[%c0_8, %c0_9, %c0_10] : memref<1x4x128xf32, #tpu.memory_space<vmem>>, vector<1x4x128xf32>
    tpu.vector_store %arg3[%c0_8, %c0_9, %c0_10], %49 {strides = array<i32>} : memref<1x4x128xf32, #tpu.memory_space<vmem>>, vector<1x4x128xf32>,
    return
  }
  func.func @transform_0(%arg0: i32) -> i32 {
    %c0_i32 = arith.constant 0 : i32
    %c0_i32_0 = arith.constant 0 : i32
    return %c0_i32 : i32
  }
  func.func @transform_1(%arg0: i32) -> (i32, i32, i32) {
    %c0_i32 = arith.constant 0 : i32
    %c0_i32_0 = arith.constant 0 : i32
    %c0_i32_1 = arith.constant 0 : i32
    return %arg0, %c0_i32, %c0_i32_0 : i32, i32, i32
  }
  func.func @transform_2(%arg0: i32) -> (i32, i32, i32) {
    %c0_i32 = arith.constant 0 : i32
    %c0_i32_0 = arith.constant 0 : i32
    %c0_i32_1 = arith.constant 0 : i32
    return %arg0, %c0_i32, %c0_i32_0 : i32, i32, i32
  }
}

</mosaic_0001>

<llo_original>
// kernel: tpu_custom_call.1
$region0: #{tpu_custom_call.1}
  #allocation0 [shape = 'u32[]', space=smem, size = 0x4, offset = 0x4, fixed_abs, tag = 'smem constant byte address 0x4 - core index']
  #allocation1 [shape = 'u32[144,128]{1,0:T(1,128)}', space=vmem, size = 0x12000, scoped, tag = 'internal scratch']
  %s0 = inlined_call_operand.hbm [shape: f32[8], index: 0, kind: input, shape index: {}]
  %s1 = inlined_call_operand.hbm [shape: f32[2,4,128], index: 1, kind: input, shape index: {}]
  %s2 = inlined_call_operand.hbm [shape: f32[2,4,128], index: 2, kind: output, shape index: {}]
  %s3 = sld [smem:[#allocation0]]
  $region49: #{tpu_custom_call.1} parent=0
    _
  %s5 = ssub.s32 1, %s3
  %s6 = scalar_select 0, %s5, %s3
  $region1: #{tpu_custom_call.1} parent=0
    #allocation2 [shape = 'u8[512]{0}', space=smem, size = 0x200, scoped, tag = 'input window, operand 0, single buffered']
    #allocation3 [shape = 's32[2]{0}', space=sflag, size = 0x8, scoped, tag = 'scoped memory for tpu_custom_call.1']
    #allocation4 [shape = 's32[2]{0}', space=sflag, size = 0x8, scoped, tag = 'scoped memory for tpu_custom_call.1']
    #allocation5 [shape = 's32[2]{0}', space=sflag, size = 0x8, scoped, tag = 'scoped memory for tpu_custom_call.1']
    #allocation6 [shape = 'u8[4096]{0}', space=vmem, size = 0x1000, scoped, tag = 'input window, operand 1']
    #allocation7 [shape = 'u8[4096]{0}', space=vmem, size = 0x1000, scoped, tag = 'output window, operand 0']
    %7 = vsyncpa [#allocation5], 0
    %8 = vsyncpa [#allocation3], 0
    %s9 = scalar_lea.sflag [#allocation3], 1
    %10 = vsyncpa %s9, 0
    %11 = vsyncpa [#allocation4], 0
    %s12 = scalar_lea.sflag [#allocation4], 1
    %13 = vsyncpa %s12, 0
    loop: start=0, step=1, limit=4
    $region2: #{tpu_custom_call.1} parent=1 // loop_pre_header
      _
    $region3: #{tpu_custom_call.1} parent=1 // loop_header
      %s15 = sphi 0, %s19
      %p16 = scmp.ge.s32.totalorder %s15, 4
      %s23 = sphi 0, %s23
      %s25 = sphi 0, %s23
      %s26 = sphi 0, %s25
      %s40 = sphi 0, %s26
      %s46 = sphi 0, %s48
      %s49 = sphi 0, %s46
      %s50 = sphi 0, %s49
      %s66 = sphi 0, %s50
      %s72 = sphi 0, %s74
      %s75 = sphi 0, %s72
      %s76 = sphi 0, %s75
      %s92 = sphi 0, %s76
    $region4: #{tpu_custom_call.1} parent=1 // loop_header_branch
      %18 = sbr.rel (%p16) target = $region8
    $region5: #{tpu_custom_call.1} parent=1 // loop_body
      %s20 = ssub.s32 %s15, 1
      %s21 = ssub.s32 %s15, 2
      %s22 = sadd.s32 %s15, 1
      %s24 = sadd.s32 %s23, 1
      %p27 = scmp.eq.s32.totalorder %s15, 1
      %p28 = scmp.ne.s32.totalorder %s23, %s25
      %p29 = scmp.eq.s32.totalorder %s15, 0
      %p30 = por %p28, %p29
      %p31 = scmp.ne.s32.totalorder %s23, %s25
      %p32 = scmp.eq.s32.totalorder %s20, 1
      %p33 = por %p31, %p32
      %p34 = scmp.ne.s32.totalorder %s25, %s26
      %p35 = scmp.eq.s32.totalorder %s20, 0
      %p36 = por %p34, %p35
      %p37 = scmp.ne.s32.totalorder %s25, %s26
      %p38 = scmp.eq.s32.totalorder %s21, 1
      %p39 = por %p37, %p38
      %p41 = scmp.ne.s32.totalorder %s26, %s40
      %p42 = scmp.eq.s32.totalorder %s21, 0
      %p43 = por %p41, %p42
      %s44 = ssub.s32 %s15, %s22
      %p45 = scmp.eq.s32.totalorder %s44, 0
      %s47 = sadd.s32 %s46, 1
      %s48 = scalar_select %p45, %s46, %s47
      %p51 = pneg %p45
      %p52 = scmp.eq.s32.totalorder %s15, 1
      %p53 = por %p51, %p52
      %p54 = scmp.ne.s32.totalorder %s46, %s49
      %p55 = scmp.eq.s32.totalorder %s15, 0
      %p56 = por %p54, %p55
      %p57 = scmp.ne.s32.totalorder %s46, %s49
      %p58 = scmp.eq.s32.totalorder %s20, 1
      %p59 = por %p57, %p58
      %p60 = scmp.ne.s32.totalorder %s49, %s50
      %p61 = scmp.eq.s32.totalorder %s20, 0
      %p62 = por %p60, %p61
      %p63 = scmp.ne.s32.totalorder %s49, %s50
      %p64 = scmp.eq.s32.totalorder %s21, 1
      %p65 = por %p63, %p64
      %p67 = scmp.ne.s32.totalorder %s50, %s66
      %p68 = scmp.eq.s32.totalorder %s21, 0
      %p69 = por %p67, %p68
      %s70 = ssub.s32 %s15, %s22
      %p71 = scmp.eq.s32.totalorder %s70, 0
      %s73 = sadd.s32 %s72, 1
      %s74 = scalar_select %p71, %s72, %s73
      %p77 = pneg %p71
      %p78 = scmp.eq.s32.totalorder %s15, 1
      %p79 = por %p77, %p78
      %p80 = scmp.ne.s32.totalorder %s72, %s75
      %p81 = scmp.eq.s32.totalorder %s15, 0
      %p82 = por %p80, %p81
      %p83 = scmp.ne.s32.totalorder %s72, %s75
      %p84 = scmp.eq.s32.totalorder %s20, 1
      %p85 = por %p83, %p84
      %p86 = scmp.ne.s32.totalorder %s75, %s76
      %p87 = scmp.eq.s32.totalorder %s20, 0
      %p88 = por %p86, %p87
      %p89 = scmp.ne.s32.totalorder %s75, %s76
      %p90 = scmp.eq.s32.totalorder %s21, 1
      %p91 = por %p89, %p90
      %p93 = scmp.ne.s32.totalorder %s76, %s92
      %p94 = scmp.eq.s32.totalorder %s21, 0
      %p95 = por %p93, %p94
      %p96 = scmp.le.s32.totalorder 1, %s15
      %p97 = scmp.lt.s32.totalorder %s15, 3
      %p98 = pnand %p96, %p97
      %p99 = pneg %p98
      // Predicated region
      $region9: #{tpu_custom_call.1} parent=5 // pred_check
        _
      $region10: #{tpu_custom_call.1} parent=5 // pred_check_branch
        %101 = sbr.rel (%p98) target = $region12
      $region11: #{tpu_custom_call.1} parent=5 // pred_region
        %s102 = ssub.s32 %s15, 1
        // Predicated region
        $region13: #{tpu_custom_call.1} parent=11 // pred_check
          %p103 = pneg %p36
        $region14: #{tpu_custom_call.1} parent=11 // pred_check_branch
          %105 = sbr.rel (%p103) target = $region16
        $region15: #{tpu_custom_call.1} parent=11 // pred_region
          %s107 = ssub.s32 16, 16
          %108 = vsyncadd [#allocation5], %s107
          %111 = dma.hbm_to_smem %s0, 16, [#allocation2], [#allocation5]
        $region16: #{tpu_custom_call.1} parent=11 // pred_fallthru
          _
      $region12: #{tpu_custom_call.1} parent=5 // pred_fallthru
        _
      %p112 = scmp.lt.s32.totalorder %s15, 2
      // Predicated region
      $region17: #{tpu_custom_call.1} parent=5 // pred_check
        %p113 = pneg %p112
      $region18: #{tpu_custom_call.1} parent=5 // pred_check_branch
        %115 = sbr.rel (%p113) target = $region20
      $region19: #{tpu_custom_call.1} parent=5 // pred_region
        // Predicated region
        $region21: #{tpu_custom_call.1} parent=19 // pred_check
          %p116 = pneg %p56
        $region22: #{tpu_custom_call.1} parent=19 // pred_check_branch
          %118 = sbr.rel (%p116) target = $region24
        $region23: #{tpu_custom_call.1} parent=19 // pred_region
          %s119 = sand.u32 %s46, 1
          %s120 = scalar_lea.sflag [#allocation3], %s119
          %s121 = sand.u32 %s46, 1
          %s122 = smul.addr %s121, 4
          %s123 = scalar_lea.vmem [#allocation6], %s122
          %s125 = ssub.s32 64, 64
          %126 = vsyncadd %s120, %s125
          %s127 = smul.addr %s15, 64
          %s128 = scalar_lea.hbm %s1, %s127
          %s130 = sshll.u32 %s123, 4
          %s131 = int_to_ptr.vmem [resolvable:$true] %s130
          %133 = dma.hbm_to_vmem [thread:$0]  %s128, 64, %s131, %s120
        $region24: #{tpu_custom_call.1} parent=19 // pred_fallthru
          _
      $region20: #{tpu_custom_call.1} parent=5 // pred_fallthru
        _
      %p134 = scmp.le.s32.totalorder 1, %s15
      %p135 = scmp.lt.s32.totalorder %s15, 3
      %p136 = pnand %p134, %p135
      %p137 = pneg %p136
      // Predicated region
      $region25: #{tpu_custom_call.1} parent=5 // pred_check
        _
      $region26: #{tpu_custom_call.1} parent=5 // pred_check_branch
        %139 = sbr.rel (%p136) target = $region28
      $region27: #{tpu_custom_call.1} parent=5 // pred_region
        %s140 = ssub.s32 %s15, 1
        // Predicated region
        $region29: #{tpu_custom_call.1} parent=27 // pred_check
          %p141 = pneg %p36
        $region30: #{tpu_custom_call.1} parent=27 // pred_check_branch
          %143 = sbr.rel (%p141) target = $region32
        $region31: #{tpu_custom_call.1} parent=27 // pred_region
          %144 = dma.done [#allocation5], 16
        $region32: #{tpu_custom_call.1} parent=27 // pred_fallthru
          _
        %s145 = sand.u32 %s49, 1
        %s146 = scalar_lea.sflag [#allocation3], %s145
        %s147 = sand.u32 %s49, 1
        %s148 = smul.addr %s147, 4
        %s149 = scalar_lea.vmem [#allocation6], %s148
        // Predicated region
        $region33: #{tpu_custom_call.1} parent=27 // pred_check
          %p150 = pneg %p62
        $region34: #{tpu_custom_call.1} parent=27 // pred_check_branch
          %152 = sbr.rel (%p150) target = $region36
        $region35: #{tpu_custom_call.1} parent=27 // pred_region
          %153 = dma.done %s146, 64
        $region36: #{tpu_custom_call.1} parent=27 // pred_fallthru
          _
        %154 = sfence
        %p155 = pneg %p36
        %p156 = pneg %p33
        %s157 = sand.u32 %s49, 1
        %s158 = scalar_lea.sflag [#allocation3], %s157
        %s159 = sand.u32 %s49, 1
        %s160 = smul.addr %s159, 4
        %s161 = scalar_lea.vmem [#allocation6], %s160
        %p162 = pneg %p62
        %p163 = pneg %p59
        %p164 = pneg %p88
        %p165 = pneg %p85
        %s166 = sand.u32 %s75, 1
        %s167 = scalar_lea.sflag [#allocation4], %s166
        %s168 = sand.u32 %s75, 1
        %s169 = smul.addr %s168, 4
        %s170 = scalar_lea.vmem [#allocation7], %s169
        %v171 = vld [vmem:[%s149] sm:$0xf]
        %vm172 = vcmask 1043456
        %v173 = vsel %vm172, %v171, 0.0
        %v174 = vrot.slane %v173, 4
        %v175 = vadd.f32 %v173, %v174
        %v176 = vrot.slane %v175, 2
        %v177 = vadd.f32 %v175, %v176
        %v178 = vrot.slane %v177, 1
        %v179 = vadd.f32 %v177, %v178
        %v180 = vrcp.pop 4.0
        %v181 = vmul.f32 %v179, %v180
        %v182 = vsel %vm172, %v171, -inf
        %v183 = vrot.slane %v182, 4
        %v184 = vmax.f32 %v182, %v183
        %v185 = vrot.slane %v184, 2
        %v186 = vmax.f32 %v184, %v185
        %v187 = vrot.slane %v186, 1
        %v188 = vmax.f32 %v186, %v187
        %190 = vrot.lane.b32.xlu0 %v181, 1
        %v191 = vpop.permute.xlu0 %190
        %vm193 = vcmask 7168
        %v194 = vsel %vm193, 0.0, %v191
        %195 = vrot.lane.b32.xlu0 %v181, 127
        %v196 = vpop.permute.xlu0 %195
        %vm198 = vcmask 1039360
        %v199 = vsel %vm198, %v196, 0.0
        %201 = vrot.lane.b32.xlu0 %v188, 1
        %v202 = vpop.permute.xlu0 %201
        %v204 = vsel %vm193, 0.0, %v202
        %205 = vrot.lane.b32.xlu0 %v188, 127
        %v206 = vpop.permute.xlu0 %205
        %v208 = vsel %vm198, %v206, 0.0
        %s209 = sld [smem:[#allocation2]]
        %v210 = vstv %s209
        %v211 = vmul.f32 %v210, %v194
        %s212 = sld [smem:[#allocation2 + $0x1]]
        %v213 = vstv %s212
        %v214 = vmul.f32 %v213, %v181
        %v215 = vadd.f32 %v211, %v214
        %s216 = sld [smem:[#allocation2 + $0x2]]
        %v217 = vstv %s216
        %v218 = vmul.f32 %v217, %v199
        %v219 = vadd.f32 %v215, %v218
        %s220 = sld [smem:[#allocation2 + $0x3]]
        %v221 = vstv %s220
        %v222 = vmul.f32 %v221, %v204
        %v223 = vadd.f32 %v219, %v222
        %s224 = sld [smem:[#allocation2 + $0x4]]
        %v225 = vstv %s224
        %v226 = vmul.f32 %v225, %v188
        %v227 = vadd.f32 %v223, %v226
        %s228 = sld [smem:[#allocation2 + $0x5]]
        %v229 = vstv %s228
        %v230 = vmul.f32 %v229, %v208
        %v231 = vadd.f32 %v227, %v230
        %s232 = sld [smem:[#allocation2 + $0x6]]
        %v233 = vstv %s232
        %v234 = vadd.f32 %v231, %v233
        %v235 = vxor.u32 %v234, 2147483648
        %v236 = vmul.f32 %v235, 1.442695
        %v237 = vpow.pop %v236
        %v238 = vadd.f32 %v237, 1.0
        %v239 = vrcp.pop %v238
        %v240 = vmul.f32 1.0, %v239
        %v241 = vlaneseq
        %v242 = vshrl.u32 %v241, 7
        %v243 = vsub.s32 0, %v242
        %v244 = vrot.slane %v240, %v243
        %v245 = vmul.f32 %v171, %v244
        %246 = vst [vmem:[%s170] sm:$0xf] %v245
        %s247 = sand.u32 %s75, 1
        %s248 = scalar_lea.sflag [#allocation4], %s247
        %s249 = sand.u32 %s75, 1
        %s250 = smul.addr %s249, 4
        %s251 = scalar_lea.vmem [#allocation7], %s250
        // Predicated region
        $region37: #{tpu_custom_call.1} parent=27 // pred_check
          %p252 = pneg %p85
        $region38: #{tpu_custom_call.1} parent=27 // pred_check_branch
          %254 = sbr.rel (%p252) target = $region40
        $region39: #{tpu_custom_call.1} parent=27 // pred_region
          %s256 = ssub.s32 64, 64
          %257 = vsyncadd %s248, %s256
          %s258 = smul.addr %s20, 64
          %s259 = scalar_lea.hbm %s2, %s258
          %s261 = sshll.u32 %s251, 4
          %s262 = int_to_ptr.vmem [resolvable:$true] %s261
          %264 = dma.vmem_to_hbm [thread:$0]  %s262, 64, %s259, %s248
        $region40: #{tpu_custom_call.1} parent=27 // pred_fallthru
          _
      $region28: #{tpu_custom_call.1} parent=5 // pred_fallthru
        _
      %p265 = scmp.le.s32.totalorder 2, %s15
      // Predicated region
      $region41: #{tpu_custom_call.1} parent=5 // pred_check
        %p266 = pneg %p265
      $region42: #{tpu_custom_call.1} parent=5 // pred_check_branch
        %268 = sbr.rel (%p266) target = $region44
      $region43: #{tpu_custom_call.1} parent=5 // pred_region
        %s269 = ssub.s32 %s15, 2
        // Predicated region
        $region45: #{tpu_custom_call.1} parent=43 // pred_check
          %p270 = pneg %p91
        $region46: #{tpu_custom_call.1} parent=43 // pred_check_branch
          %272 = sbr.rel (%p270) target = $region48
        $region47: #{tpu_custom_call.1} parent=43 // pred_region
          %s273 = sand.u32 %s76, 1
          %s274 = scalar_lea.sflag [#allocation4], %s273
          %s275 = sand.u32 %s76, 1
          %s276 = smul.addr %s275, 4
          %s277 = scalar_lea.vmem [#allocation7], %s276
          %278 = dma.done %s274, 64
        $region48: #{tpu_custom_call.1} parent=43 // pred_fallthru
          _
      $region44: #{tpu_custom_call.1} parent=5 // pred_fallthru
        _
    $region6: #{tpu_custom_call.1} parent=1 // loop_footer
      %s19 = sadd.s32 1, %s15
    $region7: #{tpu_custom_call.1} parent=1 // loop_footer_branch
      %14 = sbr.rel target = $region3
    $region8: #{tpu_custom_call.1} parent=1 // loop_exit
      _
    %279 = vsyncpa [#allocation3], 1
    %s280 = scalar_lea.sflag [#allocation3], 1
    %281 = vsyncpa %s280, 1
    %282 = vsyncpa [#allocation4], 1
    %s283 = scalar_lea.sflag [#allocation4], 1
    %284 = vsyncpa %s283, 1
    %285 = vsyncpa [#allocation5], 1
    %s286 = scalar_lea.sflag [#allocation5], 1
    %287 = vsyncpa %s286, 1

</llo_original>
